<compile_context>
chip_gen: v5e
topology: v5e:2x2
jax: 0.10.0
libtpu: 0.0.40
codegen_flags: <defaults>
</compile_context>

<pallas_src>
import jax
import jax.numpy as jnp
from jax import lax
from jax.experimental import pallas as pl
from jax.experimental.pallas import tpu as pltpu

_INF = -999.9  # same finite mask constant as the PyTorch module (_inf)


def denote_forward_kernel(xcol_ref, bias_ref, wconv_ref, bconv_ref,
                          bn_scale_ref, bn_shift_ref, wfgh_ref, bfgh_ref,
                          o_ref):
    M, C2 = o_ref.shape
    C = C2 // 2

    # ---- Conv1d(E -> C, kernel=K, causal right-pad) as ONE deep matmul over
    #      the 128-padded im2col contraction dim (zero rows contribute 0).
    conv = jnp.dot(xcol_ref[...], wconv_ref[...],
                   preferred_element_type=jnp.float32) + bconv_ref[...]
    conv = jnp.maximum(conv, 0.0)                                   # ReLU

    # ---- BatchNorm1d (eval running stats folded into scale/shift)
    out = conv * bn_scale_ref[...] + bn_shift_ref[...]              # f32 (M, C)

    # ---- fused f/g/h projection: one (C, 3C) matmul, lane-aligned slices
    fgh = jnp.dot(out.astype(jnp.bfloat16), wfgh_ref[...],
                  preferred_element_type=jnp.float32) + bfgh_ref[...]
    f = fgh[:, :C].astype(jnp.bfloat16)
    g = fgh[:, C:2 * C].astype(jnp.bfloat16)
    h = fgh[:, 2 * C:].astype(jnp.bfloat16)

    # ---- block-diagonal self attention over the flattened (M, C) tile
    score = lax.dot_general(f, g, (((1,), (1,)), ((), ())),
                            preferred_element_type=jnp.float32)     # (M, M)
    score = score + bias_ref[...]            # cross-seq + padded-key bias
    score = score - jnp.max(score, axis=-1, keepdims=True)
    e = jnp.exp(score)
    weights = e * pl.reciprocal(jnp.sum(e, axis=-1, keepdims=True), approx=True)
    att = jnp.dot(weights.astype(jnp.bfloat16), h,
                  preferred_element_type=jnp.float32)                # (M, C)
    att = jnp.tanh(att)

    # ---- write the two 128-lane-aligned halves of cat([out, att], -1)
    o_ref[:, :C] = out.astype(o_ref.dtype)
    o_ref[:, C:] = att.astype(o_ref.dtype)


def denote_forward(sent, mask, params, *, rows_per_tile=128):
    """sent: (B, S) int32 token ids, mask: (B, S) {0,1} floats."""
    B, S = sent.shape
    emb_table = params["embedding"]                          # (V, E)
    E = emb_table.shape[1]
    w_conv = params["w_conv"]                                # (K, E, C)
    K, _, C = w_conv.shape

    # Batch tile: M = TB*S rows per grid step.  128 fills the v5e 128x128 MXU;
    # raise rows_per_tile to 256 on v6e/v7x.  Keep >= 2 grid steps so both
    # v7x TensorCores get work.
    TB = max(1, min(B, max(1, rows_per_tile // S)))
    if B > 1 and -(-B // TB) < 2:
        TB = -(-B // 2)
    nb = -(-B // TB)
    B_pad = nb * TB
    M = TB * S
    assert M % 8 == 0 or nb == 1, "TB*S must be sublane-aligned"

    # ---- glue (layout plumbing, outside the kernel) ------------------------
    # TODO(synk): fun.dropout(p=0.2, training=True) is implemented as eval-mode identity.
    sent_embed = jnp.take(emb_table, sent, axis=0)           # (B, S, E)
    x = jnp.pad(sent_embed, ((0, B_pad - B), (0, K - 1), (0, 0)))
    # im2col: K causal taps become one deep contraction dim, zero-padded to a
    # multiple of 128 so the MXU sees full-depth unmasked tiles.
    KE = K * E
    KE_pad = -(-KE // 128) * 128
    emb_cols = jnp.concatenate([x[:, k:k + S, :] for k in range(K)], axis=-1)
    emb_cols = jnp.pad(emb_cols, ((0, 0), (0, 0), (0, KE_pad - KE)))
    xcol = emb_cols.reshape(B_pad * S, KE_pad).astype(jnp.bfloat16)

    # Precomputed additive attention bias: block-diagonal "same sequence"
    # mask folded with the key padding mask -> one (M, M) add in the kernel.
    mask_p = jnp.pad(mask.astype(jnp.float32), ((0, B_pad - B), (0, 0)))
    key_bias = ((1.0 - mask_p) * _INF).reshape(nb, 1, M)              # per key
    seq_id = jnp.repeat(jnp.arange(TB, dtype=jnp.int32), S)           # (M,)
    cross = (seq_id[:, None] != seq_id[None, :]).astype(jnp.float32) * _INF
    attn_bias = (key_bias + cross[None]).reshape(nb * M, M)           # f32

    # BatchNorm folded into scale/shift (eval-mode running statistics).
    # TODO(synk): training-mode batch statistics are not reproduced.
    bn_eps = 1e-5
    bn_scale = params["bn_gamma"] / jnp.sqrt(params["bn_var"] + bn_eps)
    bn_shift = params["bn_beta"] - params["bn_mean"] * bn_scale

    # Fused weights (bf16 operands for the MXU; f32 accumulation in-kernel).
    w_conv_flat = jnp.pad(w_conv.reshape(KE, C),
                          ((0, KE_pad - KE), (0, 0))).astype(jnp.bfloat16)
    w_fgh = jnp.concatenate([params["wf_t"], params["wg_t"], params["wh_t"]],
                            axis=1).astype(jnp.bfloat16)               # (C, 3C)
    b_fgh = jnp.concatenate([params["bf"], params["bg"], params["bh"]],
                            axis=0).reshape(1, 3 * C)

    def full(shape):
        return pl.BlockSpec(shape, lambda b: (0,) * len(shape))

    in_specs = [
        pl.BlockSpec((M, KE_pad), lambda b: (b, 0)),      # im2col'd embeddings
        pl.BlockSpec((M, M), lambda b: (b, 0)),           # attention bias
        full((KE_pad, C)), full((1, C)),                  # conv weight / bias
        full((1, C)), full((1, C)),                       # bn scale / shift
        full((C, 3 * C)), full((1, 3 * C)),               # fused f/g/h
    ]
    out_specs = pl.BlockSpec((M, 2 * C), lambda b: (b, 0))

    flops = 2 * nb * M * (KE_pad * C + 3 * C * C + 2 * M * C)
    transcendentals = nb * M * (M + C)
    bytes_accessed = (xcol.size * 2 + attn_bias.size * 4
                      + (KE_pad * C + C * 3 * C) * 2
                      + nb * M * 2 * C * 4)

    out = pl.pallas_call(
        denote_forward_kernel,
        out_shape=jax.ShapeDtypeStruct((nb * M, 2 * C), jnp.float32),
        grid=(nb,),
        in_specs=in_specs,
        out_specs=out_specs,
        compiler_params=pltpu.CompilerParams(
            dimension_semantics=("parallel",)),
        cost_estimate=pl.CostEstimate(flops=flops,
                                      transcendentals=transcendentals,
                                      bytes_accessed=bytes_accessed),
    )(xcol, attn_bias, w_conv_flat, params["b_conv"].reshape(1, C),
      bn_scale.reshape(1, C), bn_shift.reshape(1, C), w_fgh, b_fgh)
    return out.reshape(B_pad, S, 2 * C)[:B]


def _reference(sent, mask, params):
    """Pure-JAX f32 reference of the same forward pass (sanity check)."""
    emb = jnp.take(params["embedding"], sent, axis=0)
    K = params["w_conv"].shape[0]
    S = sent.shape[1]
    x = jnp.pad(emb, ((0, 0), (0, K - 1), (0, 0)))
    conv = sum(jnp.einsum("bse,ec->bsc", x[:, k:k + S, :], params["w_conv"][k])
               for k in range(K)) + params["b_conv"]
    conv = jnp.maximum(conv, 0.0)
    scale = params["bn_gamma"] / jnp.sqrt(params["bn_var"] + 1e-5)
    out = conv * scale + (params["bn_beta"] - params["bn_mean"] * scale)
    f = out @ params["wf_t"] + params["bf"]
    g = out @ params["wg_t"] + params["bg"]
    h = out @ params["wh_t"] + params["bh"]
    score = jnp.einsum("bqc,bkc->bqk", f, g)
    score = score + (1.0 - mask)[:, None, :] * _INF
    w = jax.nn.softmax(score, axis=-1)
    att = jnp.tanh(jnp.einsum("bqk,bkc->bqc", w, h))
    return jnp.concatenate([out, att], axis=-1)


if __name__ == "__main__":
    # Small, deterministic config; B big enough that grid=2 (both v7x cores).
    B, S = 32, 8
    V, E, C, K = 50, 32, 128, 3       # vocab, word_embed_size, word_out_channel, kernel

    key = jax.random.PRNGKey(0)
    ks = jax.random.split(key, 12)

    params = {
        "embedding": jax.random.normal(ks[0], (V, E), jnp.float32) * 0.1,
        "w_conv":    jax.random.normal(ks[1], (K, E, C), jnp.float32) * 0.1,
        "b_conv":    jax.random.normal(ks[2], (C,), jnp.float32) * 0.1,
        "bn_gamma":  jnp.ones((C,), jnp.float32),
        "bn_beta":   jnp.zeros((C,), jnp.float32),
        "bn_mean":   jnp.zeros((C,), jnp.float32),
        "bn_var":    jnp.ones((C,), jnp.float32),
        "wf_t":      jax.random.normal(ks[3], (C, C), jnp.float32) * 0.05,
        "bf":        jax.random.normal(ks[4], (C,), jnp.float32) * 0.05,
        "wg_t":      jax.random.normal(ks[5], (C, C), jnp.float32) * 0.05,
        "bg":        jax.random.normal(ks[6], (C,), jnp.float32) * 0.05,
        "wh_t":      jax.random.normal(ks[7], (C, C), jnp.float32) * 0.05,
        "bh":        jax.random.normal(ks[8], (C,), jnp.float32) * 0.05,
    }

    sent = jax.random.randint(ks[9], (B, S), 0, V, jnp.int32)
    lengths = jax.random.randint(ks[10], (B,), 1, S + 1)
    mask = (jnp.arange(S)[None, :] < lengths[:, None]).astype(jnp.float32)

    out = denote_forward(sent, mask, params)
    out = jax.block_until_ready(out)

    ref = _reference(sent, mask, params)
    assert out.shape == (B, S, 2 * C)
    # bf16 MXU operands + approx reciprocal -> relaxed tolerance vs f32 reference.
    assert jnp.allclose(out, ref, atol=2e-2, rtol=2e-2)
    print("KERNEL_OK")
</pallas_src>

<mosaic_0001>
module attributes {stable_mosaic.version = 11 : i64} {
  func.func @denote_forward_kernel(%arg0: i32, %arg1: memref<128x128xbf16, #tpu.memory_space<vmem>>, %arg2: memref<128x128xf32, #tpu.memory_space<vmem>>, %arg3: memref<128x128xbf16, #tpu.memory_space<vmem>>, %arg4: memref<1x128xf32, #tpu.memory_space<vmem>>, %arg5: memref<1x128xf32, #tpu.memory_space<vmem>>, %arg6: memref<1x128xf32, #tpu.memory_space<vmem>>, %arg7: memref<128x384xbf16, #tpu.memory_space<vmem>>, %arg8: memref<1x384xf32, #tpu.memory_space<vmem>>, %arg9: memref<128x256xf32, #tpu.memory_space<vmem>>) attributes {dimension_semantics = [#tpu.dimension_semantics<parallel>], iteration_bounds = array<i64: 2>, scalar_prefetch = 0 : i64, scratch_operands = 0 : i64, tpu.core_type = #tpu.core_type<tc>, window_params = [{transform_indices = @transform_0, window_bounds = array<i64: 128, 128>}, {transform_indices = @transform_1, window_bounds = array<i64: 128, 128>}, {pipeline_mode = #tpu.pipeline_mode<synchronous>, transform_indices = @transform_2, window_bounds = array<i64: 128, 128>}, {pipeline_mode = #tpu.pipeline_mode<synchronous>, transform_indices = @transform_3, window_bounds = array<i64: 1, 128>}, {pipeline_mode = #tpu.pipeline_mode<synchronous>, transform_indices = @transform_4, window_bounds = array<i64: 1, 128>}, {pipeline_mode = #tpu.pipeline_mode<synchronous>, transform_indices = @transform_5, window_bounds = array<i64: 1, 128>}, {pipeline_mode = #tpu.pipeline_mode<synchronous>, transform_indices = @transform_6, window_bounds = array<i64: 128, 384>}, {pipeline_mode = #tpu.pipeline_mode<synchronous>, transform_indices = @transform_7, window_bounds = array<i64: 1, 384>}, {transform_indices = @transform_8, window_bounds = array<i64: 128, 256>}]} {
    %c0 = arith.constant 0 : index
    %c0_0 = arith.constant 0 : index
    %0 = vector.load %arg1[%c0, %c0_0] : memref<128x128xbf16, #tpu.memory_space<vmem>>, vector<128x128xbf16>
    %c0_1 = arith.constant 0 : index
    %c0_2 = arith.constant 0 : index
    %1 = vector.load %arg3[%c0_1, %c0_2] : memref<128x128xbf16, #tpu.memory_space<vmem>>, vector<128x128xbf16>
    %cst = arith.constant dense<0.000000e+00> : vector<128x128xf32>
    %2 = tpu.matmul %0, %1, %cst {dimension_numbers = #tpu.dot_dimension_numbers<[1], [0], [0], [1], [0, 0, 1, 1], [], []>} : vector<128x128xbf16>, vector<128x128xbf16>, vector<128x128xf32> -> vector<128x128xf32>
    %c0_3 = arith.constant 0 : index
    %c0_4 = arith.constant 0 : index
    %3 = vector.load %arg4[%c0_3, %c0_4] : memref<1x128xf32, #tpu.memory_space<vmem>>, vector<1x128xf32>
    %4 = vector.broadcast %3 : vector<1x128xf32> to vector<128x128xf32>
    %5 = arith.addf %2, %4 : vector<128x128xf32>
    %cst_5 = arith.constant 0.000000e+00 : f32
    %6 = vector.broadcast %cst_5 : f32 to vector<128x128xf32>
    %7 = arith.maximumf %5, %6 : vector<128x128xf32>
    %c0_6 = arith.constant 0 : index
    %c0_7 = arith.constant 0 : index
    %8 = vector.load %arg5[%c0_6, %c0_7] : memref<1x128xf32, #tpu.memory_space<vmem>>, vector<1x128xf32>
    %9 = vector.broadcast %8 : vector<1x128xf32> to vector<128x128xf32>
    %10 = arith.mulf %7, %9 : vector<128x128xf32>
    %c0_8 = arith.constant 0 : index
    %c0_9 = arith.constant 0 : index
    %11 = vector.load %arg6[%c0_8, %c0_9] : memref<1x128xf32, #tpu.memory_space<vmem>>, vector<1x128xf32>
    %12 = vector.broadcast %11 : vector<1x128xf32> to vector<128x128xf32>
    %13 = arith.addf %10, %12 : vector<128x128xf32>
    %14 = arith.truncf %13 : vector<128x128xf32> to vector<128x128xbf16>
    %c0_10 = arith.constant 0 : index
    %c0_11 = arith.constant 0 : index
    %15 = vector.load %arg7[%c0_10, %c0_11] : memref<128x384xbf16, #tpu.memory_space<vmem>>, vector<128x384xbf16>
    %cst_12 = arith.constant dense<0.000000e+00> : vector<128x384xf32>
    %16 = tpu.matmul %14, %15, %cst_12 {dimension_numbers = #tpu.dot_dimension_numbers<[1], [0], [0], [1], [0, 0, 1, 1], [], []>} : vector<128x128xbf16>, vector<128x384xbf16>, vector<128x384xf32> -> vector<128x384xf32>
    %c0_13 = arith.constant 0 : index
    %c0_14 = arith.constant 0 : index
    %17 = vector.load %arg8[%c0_13, %c0_14] : memref<1x384xf32, #tpu.memory_space<vmem>>, vector<1x384xf32>
    %18 = vector.broadcast %17 : vector<1x384xf32> to vector<128x384xf32>
    %19 = arith.addf %16, %18 : vector<128x384xf32>
    %20 = vector.extract_strided_slice %19 {offsets = [0, 0], sizes = [128, 128], strides = [1, 1]} : vector<128x384xf32> to vector<128x128xf32>
    %21 = arith.truncf %20 : vector<128x128xf32> to vector<128x128xbf16>
    %22 = vector.extract_strided_slice %19 {offsets = [0, 128], sizes = [128, 128], strides = [1, 1]} : vector<128x384xf32> to vector<128x128xf32>
    %23 = arith.truncf %22 : vector<128x128xf32> to vector<128x128xbf16>
    %24 = vector.extract_strided_slice %19 {offsets = [0, 256], sizes = [128, 128], strides = [1, 1]} : vector<128x384xf32> to vector<128x128xf32>
    %25 = arith.truncf %24 : vector<128x128xf32> to vector<128x128xbf16>
    %cst_15 = arith.constant dense<0.000000e+00> : vector<128x128xf32>
    %26 = tpu.matmul %21, %23, %cst_15 {dimension_numbers = #tpu.dot_dimension_numbers<[1], [1], [0], [0], [0, 0, 1, 0], [], []>} : vector<128x128xbf16>, vector<128x128xbf16>, vector<128x128xf32> -> vector<128x128xf32>
    %c0_16 = arith.constant 0 : index
    %c0_17 = arith.constant 0 : index
    %27 = vector.load %arg2[%c0_16, %c0_17] : memref<128x128xf32, #tpu.memory_space<vmem>>, vector<128x128xf32>
    %28 = arith.addf %26, %27 : vector<128x128xf32>
    %cst_18 = arith.constant dense<0xFF800000> : vector<128xf32>
    %29 = vector.multi_reduction <maximumf>, %28, %cst_18 [1] : vector<128x128xf32> to vector<128xf32>
    %30 = vector.shape_cast %29 : vector<128xf32> to vector<128x1xf32>
    %31 = vector.broadcast %30 : vector<128x1xf32> to vector<128x128xf32>
    %32 = arith.subf %28, %31 : vector<128x128xf32>
    %33 = math.exp %32 : vector<128x128xf32>
    %cst_19 = arith.constant dense<0.000000e+00> : vector<128xf32>
    %34 = vector.multi_reduction <add>, %33, %cst_19 [1] : vector<128x128xf32> to vector<128xf32>
    %35 = vector.shape_cast %34 : vector<128xf32> to vector<128x1xf32>
    %36 = tpu.reciprocal %35 {approx = true} : vector<128x1xf32> -> vector<128x1xf32>
    %37 = vector.broadcast %36 : vector<128x1xf32> to vector<128x128xf32>
    %38 = arith.mulf %33, %37 : vector<128x128xf32>
    %39 = arith.truncf %38 : vector<128x128xf32> to vector<128x128xbf16>
    %cst_20 = arith.constant dense<0.000000e+00> : vector<128x128xf32>
    %40 = tpu.matmul %39, %25, %cst_20 {dimension_numbers = #tpu.dot_dimension_numbers<[1], [0], [0], [1], [0, 0, 1, 1], [], []>} : vector<128x128xbf16>, vector<128x128xbf16>, vector<128x128xf32> -> vector<128x128xf32>
    %41 = math.tanh %40 : vector<128x128xf32>
    %c0_21 = arith.constant 0 : index
    %c0_22 = arith.constant 0 : index
    %42 = vector.load %arg9[%c0_21, %c0_22] : memref<128x256xf32, #tpu.memory_space<vmem>>, vector<128x128xf32>
    tpu.vector_store %arg9[%c0_21, %c0_22], %13 {strides = array<i32>} : memref<128x256xf32, #tpu.memory_space<vmem>>, vector<128x128xf32>,
    %c0_23 = arith.constant 0 : index
    %c128 = arith.constant 128 : index
    %43 = vector.load %arg9[%c0_23, %c128] : memref<128x256xf32, #tpu.memory_space<vmem>>, vector<128x128xf32>
    tpu.vector_store %arg9[%c0_23, %c128], %41 {strides = array<i32>} : memref<128x256xf32, #tpu.memory_space<vmem>>, vector<128x128xf32>,
    return
  }
  func.func @transform_0(%arg0: i32) -> (i32, i32) {
    %c0_i32 = arith.constant 0 : i32
    %c0_i32_0 = arith.constant 0 : i32
    return %arg0, %c0_i32 : i32, i32
  }
  func.func @transform_1(%arg0: i32) -> (i32, i32) {
    %c0_i32 = arith.constant 0 : i32
    %c0_i32_0 = arith.constant 0 : i32
    return %arg0, %c0_i32 : i32, i32
  }
  func.func @transform_2(%arg0: i32) -> (i32, i32) {
    %c0_i32 = arith.constant 0 : i32
    %c0_i32_0 = arith.constant 0 : i32
    %c0_i32_1 = arith.constant 0 : i32
    return %c0_i32, %c0_i32_0 : i32, i32
  }
  func.func @transform_3(%arg0: i32) -> (i32, i32) {
    %c0_i32 = arith.constant 0 : i32
    %c0_i32_0 = arith.constant 0 : i32
    %c0_i32_1 = arith.constant 0 : i32
    return %c0_i32, %c0_i32_0 : i32, i32
  }
  func.func @transform_4(%arg0: i32) -> (i32, i32) {
    %c0_i32 = arith.constant 0 : i32
    %c0_i32_0 = arith.constant 0 : i32
    %c0_i32_1 = arith.constant 0 : i32
    return %c0_i32, %c0_i32_0 : i32, i32
  }
  func.func @transform_5(%arg0: i32) -> (i32, i32) {
    %c0_i32 = arith.constant 0 : i32
    %c0_i32_0 = arith.constant 0 : i32
    %c0_i32_1 = arith.constant 0 : i32
    return %c0_i32, %c0_i32_0 : i32, i32
  }
  func.func @transform_6(%arg0: i32) -> (i32, i32) {
    %c0_i32 = arith.constant 0 : i32
    %c0_i32_0 = arith.constant 0 : i32
    %c0_i32_1 = arith.constant 0 : i32
    return %c0_i32, %c0_i32_0 : i32, i32
  }
  func.func @transform_7(%arg0: i32) -> (i32, i32) {
    %c0_i32 = arith.constant 0 : i32
    %c0_i32_0 = arith.constant 0 : i32
    %c0_i32_1 = arith.constant 0 : i32
    return %c0_i32, %c0_i32_0 : i32, i32
  }
  func.func @transform_8(%arg0: i32) -> (i32, i32) {
    %c0_i32 = arith.constant 0 : i32
    %c0_i32_0 = arith.constant 0 : i32
    return %arg0, %c0_i32 : i32, i32
  }
}

</mosaic_0001>

<llo_original>
// kernel: tpu_custom_call.1
$region0: #{tpu_custom_call.1}
  #allocation0 [shape = 'u32[]', space=smem, size = 0x4, offset = 0x4, fixed_abs, tag = 'smem constant byte address 0x4 - core index']
  #allocation1 [shape = 'u32[72,128]{1,0:T(1,128)}', space=vmem, size = 0x9000, scoped, tag = 'internal scratch']
  %s0 = inlined_call_operand.hbm [shape: bf16[256,128], index: 0, kind: input, shape index: {}]
  %s1 = inlined_call_operand.hbm [shape: f32[256,128], index: 1, kind: input, shape index: {}]
  %s2 = inlined_call_operand.hbm [shape: bf16[128,128], index: 2, kind: input, shape index: {}]
  %s3 = inlined_call_operand.vmem [shape: f32[1,128], index: 3, kind: input, shape index: {}]
  %s4 = inlined_call_operand.vmem [shape: f32[1,128], index: 4, kind: input, shape index: {}]
  %s5 = inlined_call_operand.hbm [shape: f32[1,128], index: 5, kind: input, shape index: {}]
  %s6 = inlined_call_operand.hbm [shape: bf16[128,384], index: 6, kind: input, shape index: {}]
  %s7 = inlined_call_operand.vmem [shape: f32[1,384], index: 7, kind: input, shape index: {}]
  %s8 = inlined_call_operand.hbm [shape: f32[256,256], index: 8, kind: output, shape index: {}]
  %s9 = sld [smem:[#allocation0]]
  $region85: #{tpu_custom_call.1} parent=0
    _
  %s11 = ssub.s32 1, %s9
  %s12 = scalar_select 0, %s11, %s9
  $region1: #{tpu_custom_call.1} parent=0
    #allocation2 [shape = 'u8[65536]{0}', space=vmem, size = 0x10000, scoped, tag = 'input window, operand 0']
    #allocation3 [shape = 's32[2]{0}', space=sflag, size = 0x8, scoped, tag = 'scoped memory for tpu_custom_call.1']
    #allocation4 [shape = 's32[2]{0}', space=sflag, size = 0x8, scoped, tag = 'scoped memory for tpu_custom_call.1']
    #allocation5 [shape = 'u8[131072]{0}', space=vmem, size = 0x20000, scoped, tag = 'input window, operand 1']
    #allocation6 [shape = 's32[2]{0}', space=sflag, size = 0x8, scoped, tag = 'scoped memory for tpu_custom_call.1']
    #allocation7 [shape = 'u8[32768]{0}', space=vmem, size = 0x8000, scoped, tag = 'input window, operand 2, single buffered']
    #allocation8 [shape = 'u8[512]{0}', space=vmem, size = 0x400, scoped, tag = 'input window, operand 5, single buffered']
    #allocation9 [shape = 's32[1]{0}', space=sflag, size = 0x4, scoped, tag = 'scoped memory for tpu_custom_call.1']
    #allocation10 [shape = 'u8[98304]{0}', space=vmem, size = 0x18000, scoped, tag = 'input window, operand 6, single buffered']
    #allocation11 [shape = 'u8[262144]{0}', space=vmem, size = 0x40000, scoped, tag = 'output window, operand 0']
    %13 = vsyncpa [#allocation3], 0
    %s14 = scalar_lea.sflag [#allocation3], 1
    %15 = vsyncpa %s14, 0
    %16 = vsyncpa [#allocation6], 0
    %s17 = scalar_lea.sflag [#allocation6], 1
    %18 = vsyncpa %s17, 0
    %19 = vsyncpa [#allocation9], 0
    %20 = vsyncpa [#allocation4], 0
    %s21 = scalar_lea.sflag [#allocation4], 1
    %22 = vsyncpa %s21, 0
    loop: start=0, step=1, limit=4
    $region2: #{tpu_custom_call.1} parent=1 // loop_pre_header
      _
    $region3: #{tpu_custom_call.1} parent=1 // loop_header
      %s24 = sphi 0, %s28
      %p25 = scmp.ge.s32.totalorder %s24, 4
      %s34 = sphi 0, %s36
      %s37 = sphi 0, %s34
      %s38 = sphi 0, %s37
      %s54 = sphi 0, %s38
      %s60 = sphi 0, %s62
      %s63 = sphi 0, %s60
      %s64 = sphi 0, %s63
      %s80 = sphi 0, %s64
      %s84 = sphi 0, %s84
      %s86 = sphi 0, %s84
      %s87 = sphi 0, %s86
      %s101 = sphi 0, %s87
      %s105 = sphi 0, %s105
      %s107 = sphi 0, %s105
      %s108 = sphi 0, %s107
      %s122 = sphi 0, %s108
      %s126 = sphi 0, %s126
      %s128 = sphi 0, %s126
      %s129 = sphi 0, %s128
      %s143 = sphi 0, %s129
      %s147 = sphi 0, %s147
      %s149 = sphi 0, %s147
      %s150 = sphi 0, %s149
      %s164 = sphi 0, %s150
      %s168 = sphi 0, %s168
      %s170 = sphi 0, %s168
      %s171 = sphi 0, %s170
      %s185 = sphi 0, %s171
      %s189 = sphi 0, %s189
      %s191 = sphi 0, %s189
      %s192 = sphi 0, %s191
      %s206 = sphi 0, %s192
      %s212 = sphi 0, %s214
      %s215 = sphi 0, %s212
      %s216 = sphi 0, %s215
      %s232 = sphi 0, %s216
    $region4: #{tpu_custom_call.1} parent=1 // loop_header_branch
      %27 = sbr.rel (%p25) target = $region8
    $region5: #{tpu_custom_call.1} parent=1 // loop_body
      %s29 = ssub.s32 %s24, 1
      %s30 = ssub.s32 %s24, 2
      %s31 = sadd.s32 %s24, 1
      %s32 = ssub.s32 %s24, %s31
      %p33 = scmp.eq.s32.totalorder %s32, 0
      %s35 = sadd.s32 %s34, 1
      %s36 = scalar_select %p33, %s34, %s35
      %p39 = pneg %p33
      %p40 = scmp.eq.s32.totalorder %s24, 1
      %p41 = por %p39, %p40
      %p42 = scmp.ne.s32.totalorder %s34, %s37
      %p43 = scmp.eq.s32.totalorder %s24, 0
      %p44 = por %p42, %p43
      %p45 = scmp.ne.s32.totalorder %s34, %s37
      %p46 = scmp.eq.s32.totalorder %s29, 1
      %p47 = por %p45, %p46
      %p48 = scmp.ne.s32.totalorder %s37, %s38
      %p49 = scmp.eq.s32.totalorder %s29, 0
      %p50 = por %p48, %p49
      %p51 = scmp.ne.s32.totalorder %s37, %s38
      %p52 = scmp.eq.s32.totalorder %s30, 1
      %p53 = por %p51, %p52
      %p55 = scmp.ne.s32.totalorder %s38, %s54
      %p56 = scmp.eq.s32.totalorder %s30, 0
      %p57 = por %p55, %p56
      %s58 = ssub.s32 %s24, %s31
      %p59 = scmp.eq.s32.totalorder %s58, 0
      %s61 = sadd.s32 %s60, 1
      %s62 = scalar_select %p59, %s60, %s61
      %p65 = pneg %p59
      %p66 = scmp.eq.s32.totalorder %s24, 1
      %p67 = por %p65, %p66
      %p68 = scmp.ne.s32.totalorder %s60, %s63
      %p69 = scmp.eq.s32.totalorder %s24, 0
      %p70 = por %p68, %p69
      %p71 = scmp.ne.s32.totalorder %s60, %s63
      %p72 = scmp.eq.s32.totalorder %s29, 1
      %p73 = por %p71, %p72
      %p74 = scmp.ne.s32.totalorder %s63, %s64
      %p75 = scmp.eq.s32.totalorder %s29, 0
      %p76 = por %p74, %p75
      %p77 = scmp.ne.s32.totalorder %s63, %s64
      %p78 = scmp.eq.s32.totalorder %s30, 1
      %p79 = por %p77, %p78
      %p81 = scmp.ne.s32.totalorder %s64, %s80
      %p82 = scmp.eq.s32.totalorder %s30, 0
      %p83 = por %p81, %p82
      %s85 = sadd.s32 %s84, 1
      %p88 = scmp.eq.s32.totalorder %s24, 1
      %p89 = scmp.ne.s32.totalorder %s84, %s86
      %p90 = scmp.eq.s32.totalorder %s24, 0
      %p91 = por %p89, %p90
      %p92 = scmp.ne.s32.totalorder %s84, %s86
      %p93 = scmp.eq.s32.totalorder %s29, 1
      %p94 = por %p92, %p93
      %p95 = scmp.ne.s32.totalorder %s86, %s87
      %p96 = scmp.eq.s32.totalorder %s29, 0
      %p97 = por %p95, %p96
      %p98 = scmp.ne.s32.totalorder %s86, %s87
      %p99 = scmp.eq.s32.totalorder %s30, 1
      %p100 = por %p98, %p99
      %p102 = scmp.ne.s32.totalorder %s87, %s101
      %p103 = scmp.eq.s32.totalorder %s30, 0
      %p104 = por %p102, %p103
      %s106 = sadd.s32 %s105, 1
      %p109 = scmp.eq.s32.totalorder %s24, 1
      %p110 = scmp.ne.s32.totalorder %s105, %s107
      %p111 = scmp.eq.s32.totalorder %s24, 0
      %p112 = por %p110, %p111
      %p113 = scmp.ne.s32.totalorder %s105, %s107
      %p114 = scmp.eq.s32.totalorder %s29, 1
      %p115 = por %p113, %p114
      %p116 = scmp.ne.s32.totalorder %s107, %s108
      %p117 = scmp.eq.s32.totalorder %s29, 0
      %p118 = por %p116, %p117
      %p119 = scmp.ne.s32.totalorder %s107, %s108
      %p120 = scmp.eq.s32.totalorder %s30, 1
      %p121 = por %p119, %p120
      %p123 = scmp.ne.s32.totalorder %s108, %s122
      %p124 = scmp.eq.s32.totalorder %s30, 0
      %p125 = por %p123, %p124
      %s127 = sadd.s32 %s126, 1
      %p130 = scmp.eq.s32.totalorder %s24, 1
      %p131 = scmp.ne.s32.totalorder %s126, %s128
      %p132 = scmp.eq.s32.totalorder %s24, 0
      %p133 = por %p131, %p132
      %p134 = scmp.ne.s32.totalorder %s126, %s128
      %p135 = scmp.eq.s32.totalorder %s29, 1
      %p136 = por %p134, %p135
      %p137 = scmp.ne.s32.totalorder %s128, %s129
      %p138 = scmp.eq.s32.totalorder %s29, 0
      %p139 = por %p137, %p138
      %p140 = scmp.ne.s32.totalorder %s128, %s129
      %p141 = scmp.eq.s32.totalorder %s30, 1
      %p142 = por %p140, %p141
      %p144 = scmp.ne.s32.totalorder %s129, %s143
      %p145 = scmp.eq.s32.totalorder %s30, 0
      %p146 = por %p144, %p145
      %s148 = sadd.s32 %s147, 1
      %p151 = scmp.eq.s32.totalorder %s24, 1
      %p152 = scmp.ne.s32.totalorder %s147, %s149
      %p153 = scmp.eq.s32.totalorder %s24, 0
      %p154 = por %p152, %p153
      %p155 = scmp.ne.s32.totalorder %s147, %s149
      %p156 = scmp.eq.s32.totalorder %s29, 1
      %p157 = por %p155, %p156
      %p158 = scmp.ne.s32.totalorder %s149, %s150
      %p159 = scmp.eq.s32.totalorder %s29, 0
      %p160 = por %p158, %p159
      %p161 = scmp.ne.s32.totalorder %s149, %s150
      %p162 = scmp.eq.s32.totalorder %s30, 1
      %p163 = por %p161, %p162
      %p165 = scmp.ne.s32.totalorder %s150, %s164
      %p166 = scmp.eq.s32.totalorder %s30, 0
      %p167 = por %p165, %p166
      %s169 = sadd.s32 %s168, 1
      %p172 = scmp.eq.s32.totalorder %s24, 1
      %p173 = scmp.ne.s32.totalorder %s168, %s170
      %p174 = scmp.eq.s32.totalorder %s24, 0
      %p175 = por %p173, %p174
      %p176 = scmp.ne.s32.totalorder %s168, %s170
      %p177 = scmp.eq.s32.totalorder %s29, 1
      %p178 = por %p176, %p177
      %p179 = scmp.ne.s32.totalorder %s170, %s171
      %p180 = scmp.eq.s32.totalorder %s29, 0
      %p181 = por %p179, %p180
      %p182 = scmp.ne.s32.totalorder %s170, %s171
      %p183 = scmp.eq.s32.totalorder %s30, 1
      %p184 = por %p182, %p183
      %p186 = scmp.ne.s32.totalorder %s171, %s185
      %p187 = scmp.eq.s32.totalorder %s30, 0
      %p188 = por %p186, %p187
      %s190 = sadd.s32 %s189, 1
      %p193 = scmp.eq.s32.totalorder %s24, 1
      %p194 = scmp.ne.s32.totalorder %s189, %s191
      %p195 = scmp.eq.s32.totalorder %s24, 0
      %p196 = por %p194, %p195
      %p197 = scmp.ne.s32.totalorder %s189, %s191
      %p198 = scmp.eq.s32.totalorder %s29, 1
      %p199 = por %p197, %p198
      %p200 = scmp.ne.s32.totalorder %s191, %s192
      %p201 = scmp.eq.s32.totalorder %s29, 0
      %p202 = por %p200, %p201
      %p203 = scmp.ne.s32.totalorder %s191, %s192
      %p204 = scmp.eq.s32.totalorder %s30, 1
      %p205 = por %p203, %p204
      %p207 = scmp.ne.s32.totalorder %s192, %s206
      %p208 = scmp.eq.s32.totalorder %s30, 0
      %p209 = por %p207, %p208
      %s210 = ssub.s32 %s24, %s31
      %p211 = scmp.eq.s32.totalorder %s210, 0
      %s213 = sadd.s32 %s212, 1
      %s214 = scalar_select %p211, %s212, %s213
      %p217 = pneg %p211
      %p218 = scmp.eq.s32.totalorder %s24, 1
      %p219 = por %p217, %p218
      %p220 = scmp.ne.s32.totalorder %s212, %s215
      %p221 = scmp.eq.s32.totalorder %s24, 0
      %p222 = por %p220, %p221
      %p223 = scmp.ne.s32.totalorder %s212, %s215
      %p224 = scmp.eq.s32.totalorder %s29, 1
      %p225 = por %p223, %p224
      %p226 = scmp.ne.s32.totalorder %s215, %s216
      %p227 = scmp.eq.s32.totalorder %s29, 0
      %p228 = por %p226, %p227
      %p229 = scmp.ne.s32.totalorder %s215, %s216
      %p230 = scmp.eq.s32.totalorder %s30, 1
      %p231 = por %p229, %p230
      %p233 = scmp.ne.s32.totalorder %s216, %s232
      %p234 = scmp.eq.s32.totalorder %s30, 0
      %p235 = por %p233, %p234
      %p236 = scmp.le.s32.totalorder 1, %s24
      %p237 = scmp.lt.s32.totalorder %s24, 3
      %p238 = pnand %p236, %p237
      %p239 = pneg %p238
      // Predicated region
      $region9: #{tpu_custom_call.1} parent=5 // pred_check
        _
      $region10: #{tpu_custom_call.1} parent=5 // pred_check_branch
        %241 = sbr.rel (%p238) target = $region12
      $region11: #{tpu_custom_call.1} parent=5 // pred_region
        %s242 = ssub.s32 %s24, 1
        // Predicated region
        $region13: #{tpu_custom_call.1} parent=11 // pred_check
          %p243 = pneg %p97
        $region14: #{tpu_custom_call.1} parent=11 // pred_check_branch
          %245 = sbr.rel (%p243) target = $region16
        $region15: #{tpu_custom_call.1} parent=11 // pred_region
          %247 = vsyncadd [#allocation6], 0
          %s248 = sshll.u32 %s2, 4
          %s249 = int_to_ptr.hbm [resolvable:$true] %s248
          %s250 = sshll.u32 [#allocation7], 4
          %s251 = int_to_ptr.vmem [resolvable:$true] %s250
          %256 = dma.hbm_to_vmem [thread:$0]  %s249, 1024, %s251, [#allocation6], 64, 64, 4
        $region16: #{tpu_custom_call.1} parent=11 // pred_fallthru
          _
        // Predicated region
        $region17: #{tpu_custom_call.1} parent=11 // pred_check
          %p257 = pneg %p118
        $region18: #{tpu_custom_call.1} parent=11 // pred_check_branch
          %259 = sbr.rel (%p257) target = $region20
        $region19: #{tpu_custom_call.1} parent=11 // pred_region
          _
        $region20: #{tpu_custom_call.1} parent=11 // pred_fallthru
          _
        // Predicated region
        $region21: #{tpu_custom_call.1} parent=11 // pred_check
          %p260 = pneg %p139
        $region22: #{tpu_custom_call.1} parent=11 // pred_check_branch
          %262 = sbr.rel (%p260) target = $region24
        $region23: #{tpu_custom_call.1} parent=11 // pred_region
          _
        $region24: #{tpu_custom_call.1} parent=11 // pred_fallthru
          _
        // Predicated region
        $region25: #{tpu_custom_call.1} parent=11 // pred_check
          %p263 = pneg %p160
        $region26: #{tpu_custom_call.1} parent=11 // pred_check_branch
          %265 = sbr.rel (%p263) target = $region28
        $region27: #{tpu_custom_call.1} parent=11 // pred_region
          %267 = vsyncadd [#allocation9], 0
          %s269 = sshll.u32 %s5, 4
          %s270 = int_to_ptr.hbm [resolvable:$true] %s269
          %s271 = sshll.u32 [#allocation8], 4
          %s272 = int_to_ptr.vmem [resolvable:$true] %s271
          %274 = dma.hbm_to_vmem [thread:$0]  %s270, 16, %s272, [#allocation9]
        $region28: #{tpu_custom_call.1} parent=11 // pred_fallthru
          _
        // Predicated region
        $region29: #{tpu_custom_call.1} parent=11 // pred_check
          %p275 = pneg %p181
        $region30: #{tpu_custom_call.1} parent=11 // pred_check_branch
          %277 = sbr.rel (%p275) target = $region32
        $region31: #{tpu_custom_call.1} parent=11 // pred_region
          %279 = vsyncadd [#allocation9], 0
          %s280 = sshll.u32 %s6, 4
          %s281 = int_to_ptr.hbm [resolvable:$true] %s280
          %s282 = sshll.u32 [#allocation10], 4
          %s283 = int_to_ptr.vmem [resolvable:$true] %s282
          %288 = dma.hbm_to_vmem [thread:$0]  %s281, 3072, %s283, [#allocation9], 192, 192, 12
        $region32: #{tpu_custom_call.1} parent=11 // pred_fallthru
          _
        // Predicated region
        $region33: #{tpu_custom_call.1} parent=11 // pred_check
          %p289 = pneg %p202
        $region34: #{tpu_custom_call.1} parent=11 // pred_check_branch
          %291 = sbr.rel (%p289) target = $region36
        $region35: #{tpu_custom_call.1} parent=11 // pred_region
          _
        $region36: #{tpu_custom_call.1} parent=11 // pred_fallthru
          _
      $region12: #{tpu_custom_call.1} parent=5 // pred_fallthru
        _
      %p292 = scmp.lt.s32.totalorder %s24, 2
      // Predicated region
      $region37: #{tpu_custom_call.1} parent=5 // pred_check
        %p293 = pneg %p292
      $region38: #{tpu_custom_call.1} parent=5 // pred_check_branch
        %295 = sbr.rel (%p293) target = $region40
      $region39: #{tpu_custom_call.1} parent=5 // pred_region
        // Predicated region
        $region41: #{tpu_custom_call.1} parent=39 // pred_check
          %p296 = pneg %p44
        $region42: #{tpu_custom_call.1} parent=39 // pred_check_branch
          %298 = sbr.rel (%p296) target = $region44
        $region43: #{tpu_custom_call.1} parent=39 // pred_region
          %s299 = sand.u32 %s34, 1
          %s300 = scalar_lea.sflag [#allocation3], %s299
          %s301 = sand.u32 %s34, 1
          %s302 = smul.addr %s301, 64
          %s303 = scalar_lea.vmem [#allocation2], %s302
          %s304 = smul.u32 16, %s24
          %306 = vsyncadd %s300, 0
          %s307 = smul.addr %s304, 4
          %s308 = scalar_lea.hbm %s0, %s307
          %s309 = sshll.u32 %s308, 4
          %s310 = int_to_ptr.hbm [resolvable:$true] %s309
          %s311 = sshll.u32 %s303, 4
          %s312 = int_to_ptr.vmem [resolvable:$true] %s311
          %317 = dma.hbm_to_vmem [thread:$0]  %s310, 1024, %s312, %s300, 64, 64, 4
        $region44: #{tpu_custom_call.1} parent=39 // pred_fallthru
          _
        // Predicated region
        $region45: #{tpu_custom_call.1} parent=39 // pred_check
          %p318 = pneg %p70
        $region46: #{tpu_custom_call.1} parent=39 // pred_check_branch
          %320 = sbr.rel (%p318) target = $region48
        $region47: #{tpu_custom_call.1} parent=39 // pred_region
          %s321 = sand.u32 %s24, 1
          %s322 = scalar_lea.sflag [#allocation6], %s321
          %s323 = sand.u32 %s60, 1
          %s324 = smul.addr %s323, 128
          %s325 = scalar_lea.vmem [#allocation5], %s324
          %s326 = smul.u32 16, %s24
          %328 = vsyncadd %s322, 0
          %s329 = smul.addr %s326, 8
          %s330 = scalar_lea.hbm %s1, %s329
          %s331 = sshll.u32 %s330, 4
          %s332 = int_to_ptr.hbm [resolvable:$true] %s331
          %s333 = sshll.u32 %s325, 4
          %s334 = int_to_ptr.vmem [resolvable:$true] %s333
          %339 = dma.hbm_to_vmem [thread:$0]  %s332, 2048, %s334, %s322, 128, 128, 8
        $region48: #{tpu_custom_call.1} parent=39 // pred_fallthru
          _
      $region40: #{tpu_custom_call.1} parent=5 // pred_fallthru
        _
      %p340 = scmp.le.s32.totalorder 1, %s24
      %p341 = scmp.lt.s32.totalorder %s24, 3
      %p342 = pnand %p340, %p341
      %p343 = pneg %p342
      // Predicated region
      $region49: #{tpu_custom_call.1} parent=5 // pred_check
        _
      $region50: #{tpu_custom_call.1} parent=5 // pred_check_branch
        %345 = sbr.rel (%p342) target = $region52
      $region51: #{tpu_custom_call.1} parent=5 // pred_region
        %s346 = ssub.s32 %s24, 1
        %s347 = sand.u32 %s37, 1
        %s348 = scalar_lea.sflag [#allocation3], %s347
        %s349 = sand.u32 %s37, 1
        %s350 = smul.addr %s349, 64
        %s351 = scalar_lea.vmem [#allocation2], %s350
        // Predicated region
        $region53: #{tpu_custom_call.1} parent=51 // pred_check
          %p352 = pneg %p50
        $region54: #{tpu_custom_call.1} parent=51 // pred_check_branch
          %354 = sbr.rel (%p352) target = $region56
        $region55: #{tpu_custom_call.1} parent=51 // pred_region
          %356 = dma.done %s348, 1024
        $region56: #{tpu_custom_call.1} parent=51 // pred_fallthru
          _
        %s357 = sand.u32 %s29, 1
        %s358 = scalar_lea.sflag [#allocation6], %s357
        %s359 = sand.u32 %s63, 1
        %s360 = smul.addr %s359, 128
        %s361 = scalar_lea.vmem [#allocation5], %s360
        // Predicated region
        $region57: #{tpu_custom_call.1} parent=51 // pred_check
          %p362 = pneg %p76
        $region58: #{tpu_custom_call.1} parent=51 // pred_check_branch
          %364 = sbr.rel (%p362) target = $region60
        $region59: #{tpu_custom_call.1} parent=51 // pred_region
          %366 = dma.done %s358, 2048
        $region60: #{tpu_custom_call.1} parent=51 // pred_fallthru
          _
        // Predicated region
        $region61: #{tpu_custom_call.1} parent=51 // pred_check
          %p367 = pneg %p97
        $region62: #{tpu_custom_call.1} parent=51 // pred_check_branch
          %369 = sbr.rel (%p367) target = $region64
        $region63: #{tpu_custom_call.1} parent=51 // pred_region
          %371 = dma.done [#allocation6], 1024
        $region64: #{tpu_custom_call.1} parent=51 // pred_fallthru
          _
        // Predicated region
        $region65: #{tpu_custom_call.1} parent=51 // pred_check
          %p372 = pneg %p160
        $region66: #{tpu_custom_call.1} parent=51 // pred_check_branch
          %374 = sbr.rel (%p372) target = $region68
        $region67: #{tpu_custom_call.1} parent=51 // pred_region
          %376 = dma.done [#allocation9], 16
        $region68: #{tpu_custom_call.1} parent=51 // pred_fallthru
          _
        // Predicated region
        $region69: #{tpu_custom_call.1} parent=51 // pred_check
          %p377 = pneg %p181
        $region70: #{tpu_custom_call.1} parent=51 // pred_check_branch
          %379 = sbr.rel (%p377) target = $region72
        $region71: #{tpu_custom_call.1} parent=51 // pred_region
          %381 = dma.done [#allocation9], 3072
        $region72: #{tpu_custom_call.1} parent=51 // pred_fallthru
          _
        %s382 = sand.u32 %s37, 1
        %s383 = scalar_lea.sflag [#allocation3], %s382
        %s384 = sand.u32 %s37, 1
        %s385 = smul.addr %s384, 64
        %s386 = scalar_lea.vmem [#allocation2], %s385
        %p387 = pneg %p50
        %p388 = pneg %p47
        %s389 = sand.u32 %s29, 1
        %s390 = scalar_lea.sflag [#allocation6], %s389
        %s391 = sand.u32 %s63, 1
        %s392 = smul.addr %s391, 128
        %s393 = scalar_lea.vmem [#allocation5], %s392
        %p394 = pneg %p76
        %p395 = pneg %p73
        %p396 = pneg %p97
        %p397 = pneg %p94
        %p398 = pneg %p118
        %p399 = pneg %p115
        %p400 = pneg %p139
        %p401 = pneg %p136
        %p402 = pneg %p160
        %p403 = pneg %p157
        %p404 = pneg %p181
        %p405 = pneg %p178
        %p406 = pneg %p202
        %p407 = pneg %p199
        %p408 = pneg %p228
        %p409 = pneg %p225
        %s410 = sand.u32 %s215, 1
        %s411 = scalar_lea.sflag [#allocation4], %s410
        %s412 = sand.u32 %s215, 1
        %s413 = smul.addr %s412, 256
        %s414 = scalar_lea.vmem [#allocation11], %s413
        %s415 = smul.u32 16, %s29
        %s416 = smul.u32 16, %s29
        %s417 = smul.u32 16, %s29
        %v418 = vld [vmem:[%s351] sm:$0xf]
        %v419 = vld [vmem:[%s351 + $0x4] sm:$0xf]
        %v420 = vld [vmem:[%s351 + $0x8] sm:$0xf]
        %v421 = vld [vmem:[%s351 + $0xc] sm:$0xf]
        %v422 = vld [vmem:[%s351 + $0x10] sm:$0xf]
        %v423 = vld [vmem:[%s351 + $0x14] sm:$0xf]
        %v424 = vld [vmem:[%s351 + $0x18] sm:$0xf]
        %v425 = vld [vmem:[%s351 + $0x1c] sm:$0xf]
        %v426 = vld [vmem:[%s351 + $0x20] sm:$0xf]
        %v427 = vld [vmem:[%s351 + $0x24] sm:$0xf]
        %v428 = vld [vmem:[%s351 + $0x28] sm:$0xf]
        %v429 = vld [vmem:[%s351 + $0x2c] sm:$0xf]
        %v430 = vld [vmem:[%s351 + $0x30] sm:$0xf]
        %v431 = vld [vmem:[%s351 + $0x34] sm:$0xf]
        %v432 = vld [vmem:[%s351 + $0x38] sm:$0xf]
        %v433 = vld [vmem:[%s351 + $0x3c] sm:$0xf]
        %v434 = vld [vmem:[#allocation7] sm:$0xf]
        %v435 = vld [vmem:[#allocation7 + $0x4] sm:$0xf]
        %v436 = vld [vmem:[#allocation7 + $0x8] sm:$0xf]
        %v437 = vld [vmem:[#allocation7 + $0xc] sm:$0xf]
        %v438 = vld [vmem:[#allocation7 + $0x10] sm:$0xf]
        %v439 = vld [vmem:[#allocation7 + $0x14] sm:$0xf]
        %v440 = vld [vmem:[#allocation7 + $0x18] sm:$0xf]
        %v441 = vld [vmem:[#allocation7 + $0x1c] sm:$0xf]
        %v442 = vld [vmem:[#allocation7 + $0x20] sm:$0xf]
        %v443 = vld [vmem:[#allocation7 + $0x24] sm:$0xf]
        %v444 = vld [vmem:[#allocation7 + $0x28] sm:$0xf]
        %v445 = vld [vmem:[#allocation7 + $0x2c] sm:$0xf]
        %v446 = vld [vmem:[#allocation7 + $0x30] sm:$0xf]
        %v447 = vld [vmem:[#allocation7 + $0x34] sm:$0xf]
        %v448 = vld [vmem:[#allocation7 + $0x38] sm:$0xf]
        %v449 = vld [vmem:[#allocation7 + $0x3c] sm:$0xf]
        %v450 = vld [vmem:[%s3] sm:$0x1]
        %v452 = vperm.slane %v450, 0
        %v470 = vunpack.c.l.b16 %v418
        %v471 = vunpack.c.l.b16 %v419
        %v472 = vunpack.c.l.b16 %v420
        %v473 = vunpack.c.l.b16 %v421
        %v474 = vunpack.c.l.b16 %v422
        %v475 = vunpack.c.l.b16 %v423
        %v476 = vunpack.c.l.b16 %v424
        %v477 = vunpack.c.l.b16 %v425
        %v478 = vunpack.c.l.b16 %v426
        %v479 = vunpack.c.l.b16 %v427
        %v480 = vunpack.c.l.b16 %v428
        %v481 = vunpack.c.l.b16 %v429
        %v482 = vunpack.c.l.b16 %v430
        %v483 = vunpack.c.l.b16 %v431
        %v484 = vunpack.c.l.b16 %v432
        %v485 = vunpack.c.l.b16 %v433
        %v486 = vpack.c.b16 %v471, %v470
        %v487 = vpack.c.b16 %v473, %v472
        %v488 = vpack.c.b16 %v475, %v474
        %v489 = vpack.c.b16 %v477, %v476
        %v490 = vpack.c.b16 %v479, %v478
        %v491 = vpack.c.b16 %v481, %v480
        %v492 = vpack.c.b16 %v483, %v482
        %v493 = vpack.c.b16 %v485, %v484
        %v518 = vunpack.c.l.b16 %v434
        %v519 = vunpack.c.l.b16 %v435
        %v520 = vunpack.c.l.b16 %v436
        %v521 = vunpack.c.l.b16 %v437
        %v522 = vunpack.c.l.b16 %v438
        %v523 = vunpack.c.l.b16 %v439
        %v524 = vunpack.c.l.b16 %v440
        %v525 = vunpack.c.l.b16 %v441
        %v526 = vunpack.c.l.b16 %v442
        %v527 = vunpack.c.l.b16 %v443
        %v528 = vunpack.c.l.b16 %v444
        %v529 = vunpack.c.l.b16 %v445
        %v530 = vunpack.c.l.b16 %v446
        %v531 = vunpack.c.l.b16 %v447
        %v532 = vunpack.c.l.b16 %v448
        %v533 = vunpack.c.l.b16 %v449
        %v534 = vpack.c.b16 %v519, %v518
        %v535 = vpack.c.b16 %v521, %v520
        %v536 = vpack.c.b16 %v523, %v522
        %v537 = vpack.c.b16 %v525, %v524
        %v538 = vpack.c.b16 %v527, %v526
        %v539 = vpack.c.b16 %v529, %v528
        %v540 = vpack.c.b16 %v531, %v530
        %v541 = vpack.c.b16 %v533, %v532
        %550 = vmatpush.bf16.msra.mxu0 %v541
        %551 = vmatpush.bf16.msra.mxu0 %v540
        %552 = vmatpush.bf16.msra.mxu0 %v539
        %553 = vmatpush.bf16.msra.mxu0 %v538
        %554 = vmatpush.bf16.msra.mxu0 %v537
        %555 = vmatpush.bf16.msra.mxu0 %v536
        %556 = vmatpush.bf16.msra.mxu0 %v535
        %557 = vmatpush.bf16.msra.mxu0 %v534
        %558 = vmatmul.bf16.gmra.mxu0 %v486
        %v559 = vpop.f32.mrf.mxu0
        %v560 = vadd.f32 %v452, %v559
        %v561 = vpop.f32.mrf.mxu0
        %v562 = vadd.f32 %v452, %v561
        %563 = vmatmul.bf16.gmra.mxu0 %v487
        %v564 = vpop.f32.mrf.mxu0
        %v565 = vadd.f32 %v452, %v564
        %v566 = vpop.f32.mrf.mxu0
        %v567 = vadd.f32 %v452, %v566
        %568 = vmatmul.bf16.gmra.mxu0 %v488
        %v569 = vpop.f32.mrf.mxu0
        %v570 = vadd.f32 %v452, %v569
        %v571 = vpop.f32.mrf.mxu0
        %v572 = vadd.f32 %v452, %v571
        %573 = vmatmul.bf16.gmra.mxu0 %v489
        %v574 = vpop.f32.mrf.mxu0
        %v575 = vadd.f32 %v452, %v574
        %v576 = vpop.f32.mrf.mxu0
        %v577 = vadd.f32 %v452, %v576
        %578 = vmatmul.bf16.gmra.mxu0 %v490
        %v579 = vpop.f32.mrf.mxu0
        %v580 = vadd.f32 %v452, %v579
        %v581 = vpop.f32.mrf.mxu0
        %v582 = vadd.f32 %v452, %v581
        %583 = vmatmul.bf16.gmra.mxu0 %v491
        %v584 = vpop.f32.mrf.mxu0
        %v585 = vadd.f32 %v452, %v584
        %v586 = vpop.f32.mrf.mxu0
        %v587 = vadd.f32 %v452, %v586
        %588 = vmatmul.bf16.gmra.mxu0 %v492
        %v589 = vpop.f32.mrf.mxu0
        %v590 = vadd.f32 %v452, %v589
        %v591 = vpop.f32.mrf.mxu0
        %v592 = vadd.f32 %v452, %v591
        %593 = vmatmul.bf16.gmra.mxu0 %v493
        %v594 = vpop.f32.mrf.mxu0
        %v595 = vadd.f32 %v452, %v594
        %v596 = vpop.f32.mrf.mxu0
        %v597 = vadd.f32 %v452, %v596
        %598 = vdwg.mxu0
        %v599 = vmax.f32 %v560, 0.0
        %v600 = vmax.f32 %v562, 0.0
        %v601 = vmax.f32 %v565, 0.0
        %v602 = vmax.f32 %v567, 0.0
        %v603 = vmax.f32 %v570, 0.0
        %v604 = vmax.f32 %v572, 0.0
        %v605 = vmax.f32 %v575, 0.0
        %v606 = vmax.f32 %v577, 0.0
        %v607 = vmax.f32 %v580, 0.0
        %v608 = vmax.f32 %v582, 0.0
        %v609 = vmax.f32 %v585, 0.0
        %v610 = vmax.f32 %v587, 0.0
        %v611 = vmax.f32 %v590, 0.0
        %v612 = vmax.f32 %v592, 0.0
        %v613 = vmax.f32 %v595, 0.0
        %v614 = vmax.f32 %v597, 0.0
        %v615 = vld [vmem:[%s4] sm:$0x1]
        %v617 = vperm.slane %v615, 0
        %v619 = vmul.f32 %v599, %v617
        %v620 = vmul.f32 %v600, %v617
        %v621 = vmul.f32 %v601, %v617
        %v622 = vmul.f32 %v602, %v617
        %v623 = vmul.f32 %v603, %v617
        %v624 = vmul.f32 %v604, %v617
        %v625 = vmul.f32 %v605, %v617
        %v626 = vmul.f32 %v606, %v617
        %v627 = vmul.f32 %v607, %v617
        %v628 = vmul.f32 %v608, %v617
        %v629 = vmul.f32 %v609, %v617
        %v630 = vmul.f32 %v610, %v617
        %v631 = vmul.f32 %v611, %v617
        %v632 = vmul.f32 %v612, %v617
        %v633 = vmul.f32 %v613, %v617
        %v634 = vmul.f32 %v614, %v617
        %v635 = vld [vmem:[#allocation8] sm:$0x1]
        %v637 = vperm.slane %v635, 0
        %v639 = vadd.f32 %v619, %v637
        %v640 = vadd.f32 %v620, %v637
        %v641 = vadd.f32 %v621, %v637
        %v642 = vadd.f32 %v622, %v637
        %v643 = vadd.f32 %v623, %v637
        %v644 = vadd.f32 %v624, %v637
        %v645 = vadd.f32 %v625, %v637
        %v646 = vadd.f32 %v626, %v637
        %v647 = vadd.f32 %v627, %v637
        %v648 = vadd.f32 %v628, %v637
        %v649 = vadd.f32 %v629, %v637
        %v650 = vadd.f32 %v630, %v637
        %v651 = vadd.f32 %v631, %v637
        %v652 = vadd.f32 %v632, %v637
        %v653 = vadd.f32 %v633, %v637
        %v654 = vadd.f32 %v634, %v637
        %v655 = vpack.c.bf16 %v640, %v639
        %v656 = vpack.c.bf16 %v642, %v641
        %v657 = vpack.c.bf16 %v644, %v643
        %v658 = vpack.c.bf16 %v646, %v645
        %v659 = vpack.c.bf16 %v648, %v647
        %v660 = vpack.c.bf16 %v650, %v649
        %v661 = vpack.c.bf16 %v652, %v651
        %v662 = vpack.c.bf16 %v654, %v653
        %v663 = vld [vmem:[#allocation10] sm:$0xff]
        %v664 = vld [vmem:[#allocation10 + $0x8] sm:$0xf]
        %v665 = vld [vmem:[#allocation10 + $0xc] sm:$0xff]
        %v666 = vld [vmem:[#allocation10 + $0x14] sm:$0xf]
        %v667 = vld [vmem:[#allocation10 + $0x18] sm:$0xff]
        %v668 = vld [vmem:[#allocation10 + $0x20] sm:$0xf]
        %v669 = vld [vmem:[#allocation10 + $0x24] sm:$0xff]
        %v670 = vld [vmem:[#allocation10 + $0x2c] sm:$0xf]
        %v671 = vld [vmem:[#allocation10 + $0x30] sm:$0xff]
        %v672 = vld [vmem:[#allocation10 + $0x38] sm:$0xf]
        %v673 = vld [vmem:[#allocation10 + $0x3c] sm:$0xff]
        %v674 = vld [vmem:[#allocation10 + $0x44] sm:$0xf]
        %v675 = vld [vmem:[#allocation10 + $0x48] sm:$0xff]
        %v676 = vld [vmem:[#allocation10 + $0x50] sm:$0xf]
        %v677 = vld [vmem:[#allocation10 + $0x54] sm:$0xff]
        %v678 = vld [vmem:[#allocation10 + $0x5c] sm:$0xf]
        %v679 = vld [vmem:[#allocation10 + $0x60] sm:$0xff]
        %v680 = vld [vmem:[#allocation10 + $0x68] sm:$0xf]
        %v681 = vld [vmem:[#allocation10 + $0x6c] sm:$0xff]
        %v682 = vld [vmem:[#allocation10 + $0x74] sm:$0xf]
        %v683 = vld [vmem:[#allocation10 + $0x78] sm:$0xff]
        %v684 = vld [vmem:[#allocation10 + $0x80] sm:$0xf]
        %v685 = vld [vmem:[#allocation10 + $0x84] sm:$0xff]
        %v686 = vld [vmem:[#allocation10 + $0x8c] sm:$0xf]
        %v687 = vld [vmem:[#allocation10 + $0x90] sm:$0xff]
        %v688 = vld [vmem:[#allocation10 + $0x98] sm:$0xf]
        %v689 = vld [vmem:[#allocation10 + $0x9c] sm:$0xff]
        %v690 = vld [vmem:[#allocation10 + $0xa4] sm:$0xf]
        %v691 = vld [vmem:[#allocation10 + $0xa8] sm:$0xff]
        %v692 = vld [vmem:[#allocation10 + $0xb0] sm:$0xf]
        %v693 = vld [vmem:[#allocation10 + $0xb4] sm:$0xff]
        %v694 = vld [vmem:[#allocation10 + $0xbc] sm:$0xf]
        %v695 = vld [vmem:[%s7] sm:$0x7]
        %v697 = vperm.slane %v695, 0
        %v698 = vperm.slane %v695, 1
        %v699 = vperm.slane %v695, 2
        %v735 = vunpack.c.l.b16 %v663
        %v736 = vunpack.c.h.b16 %v663
        %v737 = vunpack.c.l.b16 %v664
        %v738 = vunpack.c.l.b16 %v665
        %v739 = vunpack.c.h.b16 %v665
        %v740 = vunpack.c.l.b16 %v666
        %v741 = vunpack.c.l.b16 %v667
        %v742 = vunpack.c.h.b16 %v667
        %v743 = vunpack.c.l.b16 %v668
        %v744 = vunpack.c.l.b16 %v669
        %v745 = vunpack.c.h.b16 %v669
        %v746 = vunpack.c.l.b16 %v670
        %v747 = vunpack.c.l.b16 %v671
        %v748 = vunpack.c.h.b16 %v671
        %v749 = vunpack.c.l.b16 %v672
        %v750 = vunpack.c.l.b16 %v673
        %v751 = vunpack.c.h.b16 %v673
        %v752 = vunpack.c.l.b16 %v674
        %v753 = vunpack.c.l.b16 %v675
        %v754 = vunpack.c.h.b16 %v675
        %v755 = vunpack.c.l.b16 %v676
        %v756 = vunpack.c.l.b16 %v677
        %v757 = vunpack.c.h.b16 %v677
        %v758 = vunpack.c.l.b16 %v678
        %v759 = vunpack.c.l.b16 %v679
        %v760 = vunpack.c.h.b16 %v679
        %v761 = vunpack.c.l.b16 %v680
        %v762 = vunpack.c.l.b16 %v681
        %v763 = vunpack.c.h.b16 %v681
        %v764 = vunpack.c.l.b16 %v682
        %v765 = vunpack.c.l.b16 %v683
        %v766 = vunpack.c.h.b16 %v683
        %v767 = vunpack.c.l.b16 %v684
        %v768 = vunpack.c.l.b16 %v685
        %v769 = vunpack.c.h.b16 %v685
        %v770 = vunpack.c.l.b16 %v686
        %v771 = vunpack.c.l.b16 %v687
        %v772 = vunpack.c.h.b16 %v687
        %v773 = vunpack.c.l.b16 %v688
        %v774 = vunpack.c.l.b16 %v689
        %v775 = vunpack.c.h.b16 %v689
        %v776 = vunpack.c.l.b16 %v690
        %v777 = vunpack.c.l.b16 %v691
        %v778 = vunpack.c.h.b16 %v691
        %v779 = vunpack.c.l.b16 %v692
        %v780 = vunpack.c.l.b16 %v693
        %v781 = vunpack.c.h.b16 %v693
        %v782 = vunpack.c.l.b16 %v694
        %v783 = vpack.c.b16 %v738, %v735
        %v784 = vpack.c.b16 %v739, %v736
        %v785 = vpack.c.b16 %v740, %v737
        %v786 = vpack.c.b16 %v744, %v741
        %v787 = vpack.c.b16 %v745, %v742
        %v788 = vpack.c.b16 %v746, %v743
        %v789 = vpack.c.b16 %v750, %v747
        %v790 = vpack.c.b16 %v751, %v748
        %v791 = vpack.c.b16 %v752, %v749
        %v792 = vpack.c.b16 %v756, %v753
        %v793 = vpack.c.b16 %v757, %v754
        %v794 = vpack.c.b16 %v758, %v755
        %v795 = vpack.c.b16 %v762, %v759
        %v796 = vpack.c.b16 %v763, %v760
        %v797 = vpack.c.b16 %v764, %v761
        %v798 = vpack.c.b16 %v768, %v765
        %v799 = vpack.c.b16 %v769, %v766
        %v800 = vpack.c.b16 %v770, %v767
        %v801 = vpack.c.b16 %v774, %v771
        %v802 = vpack.c.b16 %v775, %v772
        %v803 = vpack.c.b16 %v776, %v773
        %v804 = vpack.c.b16 %v780, %v777
        %v805 = vpack.c.b16 %v781, %v778
        %v806 = vpack.c.b16 %v782, %v779
        %831 = vmatpush.bf16.msra.mxu0 %v804
        %832 = vmatpush.bf16.msra.mxu0 %v801
        %833 = vmatpush.bf16.msra.mxu0 %v798
        %834 = vmatpush.bf16.msra.mxu0 %v795
        %835 = vmatpush.bf16.msra.mxu0 %v792
        %836 = vmatpush.bf16.msra.mxu0 %v789
        %837 = vmatpush.bf16.msra.mxu0 %v786
        %838 = vmatpush.bf16.msra.mxu0 %v783
        %839 = vmatmul.bf16.gmra.mxu0 %v655
        %v840 = vpop.f32.mrf.mxu0
        %v841 = vadd.f32 %v697, %v840
        %v842 = vpop.f32.mrf.mxu0
        %v843 = vadd.f32 %v697, %v842
        %844 = vmatmul.bf16.gmra.mxu0 %v656
        %v845 = vpop.f32.mrf.mxu0
        %v846 = vadd.f32 %v697, %v845
        %v847 = vpop.f32.mrf.mxu0
        %v848 = vadd.f32 %v697, %v847
        %849 = vmatmul.bf16.gmra.mxu0 %v657
        %v850 = vpop.f32.mrf.mxu0
        %v851 = vadd.f32 %v697, %v850
        %v852 = vpop.f32.mrf.mxu0
        %v853 = vadd.f32 %v697, %v852
        %854 = vmatmul.bf16.gmra.mxu0 %v658
        %v855 = vpop.f32.mrf.mxu0
        %v856 = vadd.f32 %v697, %v855
        %v857 = vpop.f32.mrf.mxu0
        %v858 = vadd.f32 %v697, %v857
        %859 = vmatmul.bf16.gmra.mxu0 %v659
        %v860 = vpop.f32.mrf.mxu0
        %v861 = vadd.f32 %v697, %v860
        %v862 = vpop.f32.mrf.mxu0
        %v863 = vadd.f32 %v697, %v862
        %864 = vmatmul.bf16.gmra.mxu0 %v660
        %v865 = vpop.f32.mrf.mxu0
        %v866 = vadd.f32 %v697, %v865
        %v867 = vpop.f32.mrf.mxu0
        %v868 = vadd.f32 %v697, %v867
        %869 = vmatmul.bf16.gmra.mxu0 %v661
        %v870 = vpop.f32.mrf.mxu0
        %v871 = vadd.f32 %v697, %v870
        %v872 = vpop.f32.mrf.mxu0
        %v873 = vadd.f32 %v697, %v872
        %874 = vmatmul.bf16.gmra.mxu0 %v662
        %v875 = vpop.f32.mrf.mxu0
        %v876 = vadd.f32 %v697, %v875
        %v877 = vpop.f32.mrf.mxu0
        %v878 = vadd.f32 %v697, %v877
        %879 = vdwg.mxu0
        %880 = vmatpush.bf16.msra.mxu0 %v805
        %881 = vmatpush.bf16.msra.mxu0 %v802
        %882 = vmatpush.bf16.msra.mxu0 %v799
        %883 = vmatpush.bf16.msra.mxu0 %v796
        %884 = vmatpush.bf16.msra.mxu0 %v793
        %885 = vmatpush.bf16.msra.mxu0 %v790
        %886 = vmatpush.bf16.msra.mxu0 %v787
        %887 = vmatpush.bf16.msra.mxu0 %v784
        %888 = vmatmul.bf16.gmra.mxu0 %v655
        %v889 = vpop.f32.mrf.mxu0
        %v890 = vadd.f32 %v698, %v889
        %v891 = vpop.f32.mrf.mxu0
        %v892 = vadd.f32 %v698, %v891
        %893 = vmatmul.bf16.gmra.mxu0 %v656
        %v894 = vpop.f32.mrf.mxu0
        %v895 = vadd.f32 %v698, %v894
        %v896 = vpop.f32.mrf.mxu0
        %v897 = vadd.f32 %v698, %v896
        %898 = vmatmul.bf16.gmra.mxu0 %v657
        %v899 = vpop.f32.mrf.mxu0
        %v900 = vadd.f32 %v698, %v899
        %v901 = vpop.f32.mrf.mxu0
        %v902 = vadd.f32 %v698, %v901
        %903 = vmatmul.bf16.gmra.mxu0 %v658
        %v904 = vpop.f32.mrf.mxu0
        %v905 = vadd.f32 %v698, %v904
        %v906 = vpop.f32.mrf.mxu0
        %v907 = vadd.f32 %v698, %v906
        %908 = vmatmul.bf16.gmra.mxu0 %v659
        %v909 = vpop.f32.mrf.mxu0
        %v910 = vadd.f32 %v698, %v909
        %v911 = vpop.f32.mrf.mxu0
        %v912 = vadd.f32 %v698, %v911
        %913 = vmatmul.bf16.gmra.mxu0 %v660
        %v914 = vpop.f32.mrf.mxu0
        %v915 = vadd.f32 %v698, %v914
        %v916 = vpop.f32.mrf.mxu0
        %v917 = vadd.f32 %v698, %v916
        %918 = vmatmul.bf16.gmra.mxu0 %v661
        %v919 = vpop.f32.mrf.mxu0
        %v920 = vadd.f32 %v698, %v919
        %v921 = vpop.f32.mrf.mxu0
        %v922 = vadd.f32 %v698, %v921
        %923 = vmatmul.bf16.gmra.mxu0 %v662
        %v924 = vpop.f32.mrf.mxu0
        %v925 = vadd.f32 %v698, %v924
        %v926 = vpop.f32.mrf.mxu0
        %v927 = vadd.f32 %v698, %v926
        %928 = vdwg.mxu0
        %929 = vmatpush.bf16.msra.mxu0 %v806
        %930 = vmatpush.bf16.msra.mxu0 %v803
        %931 = vmatpush.bf16.msra.mxu0 %v800
        %932 = vmatpush.bf16.msra.mxu0 %v797
        %933 = vmatpush.bf16.msra.mxu0 %v794
        %934 = vmatpush.bf16.msra.mxu0 %v791
        %935 = vmatpush.bf16.msra.mxu0 %v788
        %936 = vmatpush.bf16.msra.mxu0 %v785
        %937 = vmatmul.bf16.gmra.mxu0 %v655
        %v938 = vpop.f32.mrf.mxu0
        %v939 = vadd.f32 %v699, %v938
        %v940 = vpop.f32.mrf.mxu0
        %v941 = vadd.f32 %v699, %v940
        %942 = vmatmul.bf16.gmra.mxu0 %v656
        %v943 = vpop.f32.mrf.mxu0
        %v944 = vadd.f32 %v699, %v943
        %v945 = vpop.f32.mrf.mxu0
        %v946 = vadd.f32 %v699, %v945
        %947 = vmatmul.bf16.gmra.mxu0 %v657
        %v948 = vpop.f32.mrf.mxu0
        %v949 = vadd.f32 %v699, %v948
        %v950 = vpop.f32.mrf.mxu0
        %v951 = vadd.f32 %v699, %v950
        %952 = vmatmul.bf16.gmra.mxu0 %v658
        %v953 = vpop.f32.mrf.mxu0
        %v954 = vadd.f32 %v699, %v953
        %v955 = vpop.f32.mrf.mxu0
        %v956 = vadd.f32 %v699, %v955
        %957 = vmatmul.bf16.gmra.mxu0 %v659
        %v958 = vpop.f32.mrf.mxu0
        %v959 = vadd.f32 %v699, %v958
        %v960 = vpop.f32.mrf.mxu0
        %v961 = vadd.f32 %v699, %v960
        %962 = vmatmul.bf16.gmra.mxu0 %v660
        %v963 = vpop.f32.mrf.mxu0
        %v964 = vadd.f32 %v699, %v963
        %v965 = vpop.f32.mrf.mxu0
        %v966 = vadd.f32 %v699, %v965
        %967 = vmatmul.bf16.gmra.mxu0 %v661
        %v968 = vpop.f32.mrf.mxu0
        %v969 = vadd.f32 %v699, %v968
        %v970 = vpop.f32.mrf.mxu0
        %v971 = vadd.f32 %v699, %v970
        %972 = vmatmul.bf16.gmra.mxu0 %v662
        %v973 = vpop.f32.mrf.mxu0
        %v974 = vadd.f32 %v699, %v973
        %v975 = vpop.f32.mrf.mxu0
        %v976 = vadd.f32 %v699, %v975
        %977 = vdwg.mxu0
        %v978 = vpack.c.bf16 %v843, %v841
        %v979 = vpack.c.bf16 %v848, %v846
        %v980 = vpack.c.bf16 %v853, %v851
        %v981 = vpack.c.bf16 %v858, %v856
        %v982 = vpack.c.bf16 %v863, %v861
        %v983 = vpack.c.bf16 %v868, %v866
        %v984 = vpack.c.bf16 %v873, %v871
        %v985 = vpack.c.bf16 %v878, %v876
        %v986 = vpack.c.bf16 %v892, %v890
        %v987 = vpack.c.bf16 %v897, %v895
        %v988 = vpack.c.bf16 %v902, %v900
        %v989 = vpack.c.bf16 %v907, %v905
        %v990 = vpack.c.bf16 %v912, %v910
        %v991 = vpack.c.bf16 %v917, %v915
        %v992 = vpack.c.bf16 %v922, %v920
        %v993 = vpack.c.bf16 %v927, %v925
        %v994 = vpack.c.bf16 %v941, %v939
        %v995 = vpack.c.bf16 %v946, %v944
        %v996 = vpack.c.bf16 %v951, %v949
        %v997 = vpack.c.bf16 %v956, %v954
        %v998 = vpack.c.bf16 %v961, %v959
        %v999 = vpack.c.bf16 %v966, %v964
        %v1000 = vpack.c.bf16 %v971, %v969
        %v1001 = vpack.c.bf16 %v976, %v974
        %v1002 = vld [vmem:[%s361] sm:$0xff]
        %v1003 = vld [vmem:[%s361 + $0x8] sm:$0xff]
        %v1004 = vld [vmem:[%s361 + $0x10] sm:$0xff]
        %v1005 = vld [vmem:[%s361 + $0x18] sm:$0xff]
        %v1006 = vld [vmem:[%s361 + $0x20] sm:$0xff]
        %v1007 = vld [vmem:[%s361 + $0x28] sm:$0xff]
        %v1008 = vld [vmem:[%s361 + $0x30] sm:$0xff]
        %v1009 = vld [vmem:[%s361 + $0x38] sm:$0xff]
        %v1010 = vld [vmem:[%s361 + $0x40] sm:$0xff]
        %v1011 = vld [vmem:[%s361 + $0x48] sm:$0xff]
        %v1012 = vld [vmem:[%s361 + $0x50] sm:$0xff]
        %v1013 = vld [vmem:[%s361 + $0x58] sm:$0xff]
        %v1014 = vld [vmem:[%s361 + $0x60] sm:$0xff]
        %v1015 = vld [vmem:[%s361 + $0x68] sm:$0xff]
        %v1016 = vld [vmem:[%s361 + $0x70] sm:$0xff]
        %v1017 = vld [vmem:[%s361 + $0x78] sm:$0xff]
        %1018 = vmatpush.bf16.xpose.msra.mxu0 %v993
        %1019 = vmatpush.bf16.xpose.msra.mxu0 %v992
        %1020 = vmatpush.bf16.xpose.msra.mxu0 %v991
        %1021 = vmatpush.bf16.xpose.msra.mxu0 %v990
        %1022 = vmatpush.bf16.xpose.msra.mxu0 %v989
        %1023 = vmatpush.bf16.xpose.msra.mxu0 %v988
        %1024 = vmatpush.bf16.xpose.msra.mxu0 %v987
        %1025 = vmatpush.bf16.xpose.msra.mxu0 %v986
        %1026 = vmatmul.bf16.gmra.mxu0 %v978
        %v1027 = vpop.f32.mrf.mxu0
        %v1028 = vadd.f32 %v1002, %v1027
        %v1029 = vpop.f32.mrf.mxu0
        %v1030 = vadd.f32 %v1003, %v1029
        %1031 = vmatmul.bf16.gmra.mxu0 %v979
        %v1032 = vpop.f32.mrf.mxu0
        %v1033 = vadd.f32 %v1004, %v1032
        %v1034 = vpop.f32.mrf.mxu0
        %v1035 = vadd.f32 %v1005, %v1034
        %1036 = vmatmul.bf16.gmra.mxu0 %v980
        %v1037 = vpop.f32.mrf.mxu0
        %v1038 = vadd.f32 %v1006, %v1037
        %v1039 = vpop.f32.mrf.mxu0
        %v1040 = vadd.f32 %v1007, %v1039
        %1041 = vmatmul.bf16.gmra.mxu0 %v981
        %v1042 = vpop.f32.mrf.mxu0
        %v1043 = vadd.f32 %v1008, %v1042
        %v1044 = vpop.f32.mrf.mxu0
        %v1045 = vadd.f32 %v1009, %v1044
        %1046 = vmatmul.bf16.gmra.mxu0 %v982
        %v1047 = vpop.f32.mrf.mxu0
        %v1048 = vadd.f32 %v1010, %v1047
        %v1049 = vpop.f32.mrf.mxu0
        %v1050 = vadd.f32 %v1011, %v1049
        %1051 = vmatmul.bf16.gmra.mxu0 %v983
        %v1052 = vpop.f32.mrf.mxu0
        %v1053 = vadd.f32 %v1012, %v1052
        %v1054 = vpop.f32.mrf.mxu0
        %v1055 = vadd.f32 %v1013, %v1054
        %1056 = vmatmul.bf16.gmra.mxu0 %v984
        %v1057 = vpop.f32.mrf.mxu0
        %v1058 = vadd.f32 %v1014, %v1057
        %v1059 = vpop.f32.mrf.mxu0
        %v1060 = vadd.f32 %v1015, %v1059
        %1061 = vmatmul.bf16.gmra.mxu0 %v985
        %v1062 = vpop.f32.mrf.mxu0
        %v1063 = vadd.f32 %v1016, %v1062
        %v1064 = vpop.f32.mrf.mxu0
        %v1065 = vadd.f32 %v1017, %v1064
        %1066 = vdwg.mxu0
        %1067 = vmax.xlane.f32.xlu0 %v1028
        %v1068 = vpop.xlane.xlu0 %1067
        %1069 = vmax.xlane.f32.xlu0 %v1030
        %v1070 = vpop.xlane.xlu0 %1069
        %1071 = vmax.xlane.f32.xlu0 %v1033
        %v1072 = vpop.xlane.xlu0 %1071
        %1073 = vmax.xlane.f32.xlu0 %v1035
        %v1074 = vpop.xlane.xlu0 %1073
        %1075 = vmax.xlane.f32.xlu0 %v1038
        %v1076 = vpop.xlane.xlu0 %1075
        %1077 = vmax.xlane.f32.xlu0 %v1040
        %v1078 = vpop.xlane.xlu0 %1077
        %1079 = vmax.xlane.f32.xlu0 %v1043
        %v1080 = vpop.xlane.xlu0 %1079
        %1081 = vmax.xlane.f32.xlu0 %v1045
        %v1082 = vpop.xlane.xlu0 %1081
        %1083 = vmax.xlane.f32.xlu0 %v1048
        %v1084 = vpop.xlane.xlu0 %1083
        %1085 = vmax.xlane.f32.xlu0 %v1050
        %v1086 = vpop.xlane.xlu0 %1085
        %1087 = vmax.xlane.f32.xlu0 %v1053
        %v1088 = vpop.xlane.xlu0 %1087
        %1089 = vmax.xlane.f32.xlu0 %v1055
        %v1090 = vpop.xlane.xlu0 %1089
        %1091 = vmax.xlane.f32.xlu0 %v1058
        %v1092 = vpop.xlane.xlu0 %1091
        %1093 = vmax.xlane.f32.xlu0 %v1060
        %v1094 = vpop.xlane.xlu0 %1093
        %1095 = vmax.xlane.f32.xlu0 %v1063
        %v1096 = vpop.xlane.xlu0 %1095
        %1097 = vmax.xlane.f32.xlu0 %v1065
        %v1098 = vpop.xlane.xlu0 %1097
        %v1099 = vsub.f32 %v1028, %v1068
        %v1100 = vsub.f32 %v1030, %v1070
        %v1101 = vsub.f32 %v1033, %v1072
        %v1102 = vsub.f32 %v1035, %v1074
        %v1103 = vsub.f32 %v1038, %v1076
        %v1104 = vsub.f32 %v1040, %v1078
        %v1105 = vsub.f32 %v1043, %v1080
        %v1106 = vsub.f32 %v1045, %v1082
        %v1107 = vsub.f32 %v1048, %v1084
        %v1108 = vsub.f32 %v1050, %v1086
        %v1109 = vsub.f32 %v1053, %v1088
        %v1110 = vsub.f32 %v1055, %v1090
        %v1111 = vsub.f32 %v1058, %v1092
        %v1112 = vsub.f32 %v1060, %v1094
        %v1113 = vsub.f32 %v1063, %v1096
        %v1114 = vsub.f32 %v1065, %v1098
        %v1115 = vmul.f32 %v1099, 1.442695
        %v1116 = vpow.pop %v1115
        %v1117 = vmul.f32 %v1100, 1.442695
        %v1118 = vpow.pop %v1117
        %v1119 = vmul.f32 %v1101, 1.442695
        %v1120 = vpow.pop %v1119
        %v1121 = vmul.f32 %v1102, 1.442695
        %v1122 = vpow.pop %v1121
        %v1123 = vmul.f32 %v1103, 1.442695
        %v1124 = vpow.pop %v1123
        %v1125 = vmul.f32 %v1104, 1.442695
        %v1126 = vpow.pop %v1125
        %v1127 = vmul.f32 %v1105, 1.442695
        %v1128 = vpow.pop %v1127
        %v1129 = vmul.f32 %v1106, 1.442695
        %v1130 = vpow.pop %v1129
        %v1131 = vmul.f32 %v1107, 1.442695
        %v1132 = vpow.pop %v1131
        %v1133 = vmul.f32 %v1108, 1.442695
        %v1134 = vpow.pop %v1133
        %v1135 = vmul.f32 %v1109, 1.442695
        %v1136 = vpow.pop %v1135
        %v1137 = vmul.f32 %v1110, 1.442695
        %v1138 = vpow.pop %v1137
        %v1139 = vmul.f32 %v1111, 1.442695
        %v1140 = vpow.pop %v1139
        %v1141 = vmul.f32 %v1112, 1.442695
        %v1142 = vpow.pop %v1141
        %v1143 = vmul.f32 %v1113, 1.442695
        %v1144 = vpow.pop %v1143
        %v1145 = vmul.f32 %v1114, 1.442695
        %v1146 = vpow.pop %v1145
        %1147 = vadd.xlane.f32.xlu0 %v1116
        %v1148 = vpop.xlane.xlu0 %1147
        %1149 = vadd.xlane.f32.xlu0 %v1118
        %v1150 = vpop.xlane.xlu0 %1149
        %1151 = vadd.xlane.f32.xlu0 %v1120
        %v1152 = vpop.xlane.xlu0 %1151
        %1153 = vadd.xlane.f32.xlu0 %v1122
        %v1154 = vpop.xlane.xlu0 %1153
        %1155 = vadd.xlane.f32.xlu0 %v1124
        %v1156 = vpop.xlane.xlu0 %1155
        %1157 = vadd.xlane.f32.xlu0 %v1126
        %v1158 = vpop.xlane.xlu0 %1157
        %1159 = vadd.xlane.f32.xlu0 %v1128
        %v1160 = vpop.xlane.xlu0 %1159
        %1161 = vadd.xlane.f32.xlu0 %v1130
        %v1162 = vpop.xlane.xlu0 %1161
        %1163 = vadd.xlane.f32.xlu0 %v1132
        %v1164 = vpop.xlane.xlu0 %1163
        %1165 = vadd.xlane.f32.xlu0 %v1134
        %v1166 = vpop.xlane.xlu0 %1165
        %1167 = vadd.xlane.f32.xlu0 %v1136
        %v1168 = vpop.xlane.xlu0 %1167
        %1169 = vadd.xlane.f32.xlu0 %v1138
        %v1170 = vpop.xlane.xlu0 %1169
        %1171 = vadd.xlane.f32.xlu0 %v1140
        %v1172 = vpop.xlane.xlu0 %1171
        %1173 = vadd.xlane.f32.xlu0 %v1142
        %v1174 = vpop.xlane.xlu0 %1173
        %1175 = vadd.xlane.f32.xlu0 %v1144
        %v1176 = vpop.xlane.xlu0 %1175
        %1177 = vadd.xlane.f32.xlu0 %v1146
        %v1178 = vpop.xlane.xlu0 %1177
        %v1179 = vrcp.pop %v1148
        %v1180 = vrcp.pop %v1150
        %v1181 = vrcp.pop %v1152
        %v1182 = vrcp.pop %v1154
        %v1183 = vrcp.pop %v1156
        %v1184 = vrcp.pop %v1158
        %v1185 = vrcp.pop %v1160
        %v1186 = vrcp.pop %v1162
        %v1187 = vrcp.pop %v1164
        %v1188 = vrcp.pop %v1166
        %v1189 = vrcp.pop %v1168
        %v1190 = vrcp.pop %v1170
        %v1191 = vrcp.pop %v1172
        %v1192 = vrcp.pop %v1174
        %v1193 = vrcp.pop %v1176
        %v1194 = vrcp.pop %v1178
        %v1195 = vmul.f32 %v1116, %v1179
        %v1196 = vmul.f32 %v1118, %v1180
        %v1197 = vmul.f32 %v1120, %v1181
        %v1198 = vmul.f32 %v1122, %v1182
        %v1199 = vmul.f32 %v1124, %v1183
        %v1200 = vmul.f32 %v1126, %v1184
        %v1201 = vmul.f32 %v1128, %v1185
        %v1202 = vmul.f32 %v1130, %v1186
        %v1203 = vmul.f32 %v1132, %v1187
        %v1204 = vmul.f32 %v1134, %v1188
        %v1205 = vmul.f32 %v1136, %v1189
        %v1206 = vmul.f32 %v1138, %v1190
        %v1207 = vmul.f32 %v1140, %v1191
        %v1208 = vmul.f32 %v1142, %v1192
        %v1209 = vmul.f32 %v1144, %v1193
        %v1210 = vmul.f32 %v1146, %v1194
        %v1211 = vpack.c.bf16 %v1196, %v1195
        %v1212 = vpack.c.bf16 %v1198, %v1197
        %v1213 = vpack.c.bf16 %v1200, %v1199
        %v1214 = vpack.c.bf16 %v1202, %v1201
        %v1215 = vpack.c.bf16 %v1204, %v1203
        %v1216 = vpack.c.bf16 %v1206, %v1205
        %v1217 = vpack.c.bf16 %v1208, %v1207
        %v1218 = vpack.c.bf16 %v1210, %v1209
        %1219 = vmatpush.bf16.msra.mxu0 %v1001
        %1220 = vmatpush.bf16.msra.mxu0 %v1000
        %1221 = vmatpush.bf16.msra.mxu0 %v999
        %1222 = vmatpush.bf16.msra.mxu0 %v998
        %1223 = vmatpush.bf16.msra.mxu0 %v997
        %1224 = vmatpush.bf16.msra.mxu0 %v996
        %1225 = vmatpush.bf16.msra.mxu0 %v995
        %1226 = vmatpush.bf16.msra.mxu0 %v994
        %1227 = vmatmul.bf16.gmra.mxu0 %v1211
        %v1228 = vpop.f32.mrf.mxu0
        %v1229 = vadd.f32 0.0, %v1228
        %v1230 = vpop.f32.mrf.mxu0
        %v1231 = vadd.f32 0.0, %v1230
        %1232 = vmatmul.bf16.gmra.mxu0 %v1212
        %v1233 = vpop.f32.mrf.mxu0
        %v1234 = vadd.f32 0.0, %v1233
        %v1235 = vpop.f32.mrf.mxu0
        %v1236 = vadd.f32 0.0, %v1235
        %1237 = vmatmul.bf16.gmra.mxu0 %v1213
        %v1238 = vpop.f32.mrf.mxu0
        %v1239 = vadd.f32 0.0, %v1238
        %v1240 = vpop.f32.mrf.mxu0
        %v1241 = vadd.f32 0.0, %v1240
        %1242 = vmatmul.bf16.gmra.mxu0 %v1214
        %v1243 = vpop.f32.mrf.mxu0
        %v1244 = vadd.f32 0.0, %v1243
        %v1245 = vpop.f32.mrf.mxu0
        %v1246 = vadd.f32 0.0, %v1245
        %1247 = vmatmul.bf16.gmra.mxu0 %v1215
        %v1248 = vpop.f32.mrf.mxu0
        %v1249 = vadd.f32 0.0, %v1248
        %v1250 = vpop.f32.mrf.mxu0
        %v1251 = vadd.f32 0.0, %v1250
        %1252 = vmatmul.bf16.gmra.mxu0 %v1216
        %v1253 = vpop.f32.mrf.mxu0
        %v1254 = vadd.f32 0.0, %v1253
        %v1255 = vpop.f32.mrf.mxu0
        %v1256 = vadd.f32 0.0, %v1255
        %1257 = vmatmul.bf16.gmra.mxu0 %v1217
        %v1258 = vpop.f32.mrf.mxu0
        %v1259 = vadd.f32 0.0, %v1258
        %v1260 = vpop.f32.mrf.mxu0
        %v1261 = vadd.f32 0.0, %v1260
        %1262 = vmatmul.bf16.gmra.mxu0 %v1218
        %v1263 = vpop.f32.mrf.mxu0
        %v1264 = vadd.f32 0.0, %v1263
        %v1265 = vpop.f32.mrf.mxu0
        %v1266 = vadd.f32 0.0, %v1265
        %1267 = vdwg.mxu0
        %v1268 = vtanh.pop %v1229
        %v1269 = vtanh.pop %v1231
        %v1270 = vtanh.pop %v1234
        %v1271 = vtanh.pop %v1236
        %v1272 = vtanh.pop %v1239
        %v1273 = vtanh.pop %v1241
        %v1274 = vtanh.pop %v1244
        %v1275 = vtanh.pop %v1246
        %v1276 = vtanh.pop %v1249
        %v1277 = vtanh.pop %v1251
        %v1278 = vtanh.pop %v1254
        %v1279 = vtanh.pop %v1256
        %v1280 = vtanh.pop %v1259
        %v1281 = vtanh.pop %v1261
        %v1282 = vtanh.pop %v1264
        %v1283 = vtanh.pop %v1266
        %1284 = vst [vmem:[%s414] sm:$0xff] %v639
        %1285 = vst [vmem:[%s414 + $0x10] sm:$0xff] %v640
        %1286 = vst [vmem:[%s414 + $0x20] sm:$0xff] %v641
        %1287 = vst [vmem:[%s414 + $0x30] sm:$0xff] %v642
        %1288 = vst [vmem:[%s414 + $0x40] sm:$0xff] %v643
        %1289 = vst [vmem:[%s414 + $0x50] sm:$0xff] %v644
        %1290 = vst [vmem:[%s414 + $0x60] sm:$0xff] %v645
        %1291 = vst [vmem:[%s414 + $0x70] sm:$0xff] %v646
        %1292 = vst [vmem:[%s414 + $0x80] sm:$0xff] %v647
        %1293 = vst [vmem:[%s414 + $0x90] sm:$0xff] %v648
        %1294 = vst [vmem:[%s414 + $0xa0] sm:$0xff] %v649
        %1295 = vst [vmem:[%s414 + $0xb0] sm:$0xff] %v650
        %1296 = vst [vmem:[%s414 + $0xc0] sm:$0xff] %v651
        %1297 = vst [vmem:[%s414 + $0xd0] sm:$0xff] %v652
        %1298 = vst [vmem:[%s414 + $0xe0] sm:$0xff] %v653
        %1299 = vst [vmem:[%s414 + $0xf0] sm:$0xff] %v654
        %1300 = vst [vmem:[%s414 + $0x8] sm:$0xff] %v1268
        %1301 = vst [vmem:[%s414 + $0x18] sm:$0xff] %v1269
        %1302 = vst [vmem:[%s414 + $0x28] sm:$0xff] %v1270
        %1303 = vst [vmem:[%s414 + $0x38] sm:$0xff] %v1271
        %1304 = vst [vmem:[%s414 + $0x48] sm:$0xff] %v1272
        %1305 = vst [vmem:[%s414 + $0x58] sm:$0xff] %v1273
        %1306 = vst [vmem:[%s414 + $0x68] sm:$0xff] %v1274
        %1307 = vst [vmem:[%s414 + $0x78] sm:$0xff] %v1275
        %1308 = vst [vmem:[%s414 + $0x88] sm:$0xff] %v1276
        %1309 = vst [vmem:[%s414 + $0x98] sm:$0xff] %v1277
        %1310 = vst [vmem:[%s414 + $0xa8] sm:$0xff] %v1278
        %1311 = vst [vmem:[%s414 + $0xb8] sm:$0xff] %v1279
        %1312 = vst [vmem:[%s414 + $0xc8] sm:$0xff] %v1280
        %1313 = vst [vmem:[%s414 + $0xd8] sm:$0xff] %v1281
        %1314 = vst [vmem:[%s414 + $0xe8] sm:$0xff] %v1282
        %1315 = vst [vmem:[%s414 + $0xf8] sm:$0xff] %v1283
        %s1316 = sand.u32 %s215, 1
        %s1317 = scalar_lea.sflag [#allocation4], %s1316
        %s1318 = sand.u32 %s215, 1
        %s1319 = smul.addr %s1318, 256
        %s1320 = scalar_lea.vmem [#allocation11], %s1319
        // Predicated region
        $region73: #{tpu_custom_call.1} parent=51 // pred_check
          %p1321 = pneg %p225
        $region74: #{tpu_custom_call.1} parent=51 // pred_check_branch
          %1323 = sbr.rel (%p1321) target = $region76
        $region75: #{tpu_custom_call.1} parent=51 // pred_region
          %s1324 = smul.u32 16, %s29
          %1326 = vsyncadd %s1317, 0
          %s1327 = smul.addr %s1324, 2
          %s1328 = smul.addr %s1327, 8
          %s1329 = scalar_lea.hbm %s8, %s1328
          %s1330 = sshll.u32 %s1320, 4
          %s1331 = int_to_ptr.vmem [resolvable:$true] %s1330
          %s1332 = sshll.u32 %s1329, 4
          %s1333 = int_to_ptr.hbm [resolvable:$true] %s1332
          %1338 = dma.vmem_to_hbm [thread:$0]  %s1331, 4096, %s1333, %s1317, 256, 256, 16
        $region76: #{tpu_custom_call.1} parent=51 // pred_fallthru
          _
      $region52: #{tpu_custom_call.1} parent=5 // pred_fallthru
        _
      %p1339 = scmp.le.s32.totalorder 2, %s24
      // Predicated region
      $region77: #{tpu_custom_call.1} parent=5 // pred_check
        %p1340 = pneg %p1339
      $region78: #{tpu_custom_call.1} parent=5 // pred_check_branch
        %1342 = sbr.rel (%p1340) target = $region80
      $region79: #{tpu_custom_call.1} parent=5 // pred_region
        %s1343 = ssub.s32 %s24, 2
        // Predicated region
        $region81: #{tpu_custom_call.1} parent=79 // pred_check
          %p1344 = pneg %p231
        $region82: #{tpu_custom_call.1} parent=79 // pred_check_branch
          %1346 = sbr.rel (%p1344) target = $region84
        $region83: #{tpu_custom_call.1} parent=79 // pred_region
          %s1347 = sand.u32 %s216, 1
          %s1348 = scalar_lea.sflag [#allocation4], %s1347
          %s1349 = sand.u32 %s216, 1
          %s1350 = smul.addr %s1349, 256
          %s1351 = scalar_lea.vmem [#allocation11], %s1350
          %1353 = dma.done %s1348, 4096
        $region84: #{tpu_custom_call.1} parent=79 // pred_fallthru
          _
      $region80: #{tpu_custom_call.1} parent=5 // pred_fallthru
        _
    $region6: #{tpu_custom_call.1} parent=1 // loop_footer
      %s28 = sadd.s32 1, %s24
    $region7: #{tpu_custom_call.1} parent=1 // loop_footer_branch
      %23 = sbr.rel target = $region3
    $region8: #{tpu_custom_call.1} parent=1 // loop_exit
      _
    %1354 = vsyncpa [#allocation3], 1
    %s1355 = scalar_lea.sflag [#allocation3], 1
    %1356 = vsyncpa %s1355, 1
    %1357 = vsyncpa [#allocation6], 1
    %s1358 = scalar_lea.sflag [#allocation6], 1
    %1359 = vsyncpa %s1358, 1
    %1360 = vsyncpa [#allocation9], 1
    %1361 = vsyncpa [#allocation4], 1
    %s1362 = scalar_lea.sflag [#allocation4], 1
    %1363 = vsyncpa %s1362, 1

</llo_original>
